<compile_context>
chip_gen: v7x
topology: tpu7x:2x2x1
jax: 0.10.0
libtpu: 0.0.40
codegen_flags: <defaults>
</compile_context>

<pallas_src>
import jax
import jax.numpy as jnp
from jax.experimental import pallas as pl
from jax.experimental.pallas import tpu as pltpu


def _round_up(x, m):
    return (x + m - 1) // m * m


def _physical_vmem_bytes():
    try:
        return int(pltpu.get_tpu_info().vmem_capacity_bytes)
    except Exception:
        return 64 * 1024 * 1024   # conservative (v7x-sized) fallback


def _vmem_cap_bytes():
    # Leave ~20% for Mosaic internal scratch / semaphores; never below 32 MiB.
    return max(int(0.8 * _physical_vmem_bytes()), 32 * 1024 * 1024)


def _default_tn():
    # 128 MiB-VMEM parts (v5e/v6e) can afford wider vocab tiles; v7x (64 MiB)
    # stays at 1024.
    return 2048 if _physical_vmem_bytes() >= 100 * 1024 * 1024 else 1024


def _vmem_need_bytes(tm, tn, k, out_itemsize, w_bufs):
    need = 2 * tm * k * 2                 # x tile, bf16, double-buffered
    need += w_bufs * k * tn * 2           # weight slab, bf16, w_bufs buffers
    need += 2 * 1 * tn * 4                # mean-bias row, f32, double-buffered
    need += 2 * tm * tn * out_itemsize    # output tile, double-buffered
    need += tm * tn * 4                   # fp32 matmul accumulator intermediate
    return need


def _uniform_proj_kernel(x_ref, w_ref, b_ref, o_ref):
    """x: [tm, K] bf16; w: [K, tn] bf16 (pre-scaled by 1/N); b: [1, tn] f32."""
    acc = jnp.dot(x_ref[...], w_ref[...], preferred_element_type=jnp.float32)
    o_ref[...] = (acc + b_ref[...]).astype(o_ref.dtype)


def prepare_uniform_params(weights, biases, *, tn=None,
                           param_dtype=jnp.bfloat16):
    """One-time parameter prep (hoisted out of the per-call hot path).

    weights: list of [vocab, dim_i] (nn.Linear layout); biases: list of [vocab].
    Returns the 1/N-scaled, transposed, K-concatenated, padded bf16 weight slab
    and the f32 mean bias.
    """
    n_models = len(weights)
    assert n_models == len(biases) and n_models >= 1
    vocab = int(weights[0].shape[0])
    dims = tuple(int(w.shape[1]) for w in weights)

    if tn is None:
        tn = _default_tn()
    tn_eff = min(tn, _round_up(vocab, 128))
    v_pad = _round_up(vocab, tn_eff)

    inv_n = 1.0 / n_models
    # Scale by 1/N in fp32 BEFORE the bf16 cast (avoids double rounding), then
    # concatenate along the contraction axis -> one fused-K matmul per tile.
    w_cat = jnp.concatenate(
        [jnp.asarray(w, jnp.float32).T * inv_n for w in weights], axis=0)
    k_total = int(w_cat.shape[0])
    k_pad = _round_up(k_total, 16)        # bf16 sublane-pair alignment
    w_cat = jnp.pad(w_cat, ((0, k_pad - k_total), (0, v_pad - vocab)))
    w_cat = w_cat.astype(param_dtype)

    b_mean = sum(jnp.asarray(b, jnp.float32) for b in biases) * inv_n
    b_mean = jnp.pad(b_mean, (0, v_pad - vocab)).reshape(1, v_pad)

    return dict(w_cat=w_cat, b_mean=b_mean, vocab=vocab, dims=dims,
                k_total=k_total, k_pad=k_pad, tn=tn_eff, n_models=n_models)


def uniform_strategy_forward(unprojected_outs, params, *, tm=None,
                             out_dtype=jnp.bfloat16, prob_space=False):
    """Pallas implementation of UniformStrategy.forward.

    unprojected_outs: list of [B, S, dim_i] arrays.
    params: output of prepare_uniform_params.
    Returns (logits [B, S, vocab], None).
    """
    if prob_space:
        # TODO(synk): prob_space=True (softmax over stacked logits, then
        # log-mean) cannot use the linear-mean fusion; not implemented.
        raise NotImplementedError("UniformStrategy prob_space=True is not supported")

    n_models = params["n_models"]
    w_cat, b_mean = params["w_cat"], params["b_mean"]
    vocab, tn = params["vocab"], params["tn"]
    k_total, k_pad = params["k_total"], params["k_pad"]
    dims = params["dims"]
    v_pad = b_mean.shape[1]

    assert len(unprojected_outs) == n_models
    assert tuple(int(o.shape[-1]) for o in unprojected_outs) == dims

    B, S = unprojected_outs[0].shape[:2]
    M = B * S

    # Row tile: 512 by default (1024 for large M), shrunk to a multiple of 8
    # for tiny problems so the toy test does not pay padded compute.
    if tm is None:
        tm = 1024 if M >= 8192 else 512
    tm_eff = min(tm, _round_up(M, 8))
    m_pad = _round_up(M, tm_eff)

    # Concatenate activations along the feature axis (cheap relative to the
    # M x V logits stream) -> single fused-K matmul in the kernel.
    x_cat = jnp.concatenate(
        [o.reshape(M, o.shape[-1]) for o in unprojected_outs], axis=-1)
    x_cat = x_cat.astype(jnp.bfloat16)
    x_cat = jnp.pad(x_cat, ((0, m_pad - M), (0, k_pad - k_total)))

    v_tiles = v_pad // tn
    m_tiles = m_pad // tm_eff

    # Grid order: vocab outer (weight slab resident along the inner M loop)
    # for prefill-shaped calls; for decode-shaped calls (<= 2 row tiles) make
    # vocab the inner, pipelined axis so the dominant weight stream is hidden.
    # Both axes are "parallel" so v7x's two TensorCores can split whichever
    # axis has >= 2 tiles.
    vocab_outer = m_tiles > 2
    if vocab_outer:
        grid = (v_tiles, m_tiles)
        x_map = lambda j, i: (i, 0)
        w_map = lambda j, i: (0, j)
        o_map = lambda j, i: (i, j)
    else:
        grid = (m_tiles, v_tiles)
        x_map = lambda i, j: (i, 0)
        w_map = lambda i, j: (0, j)
        o_map = lambda i, j: (i, j)

    # VMEM budget (includes the fp32 accumulator intermediate), generation-
    # aware cap: ~0.8x physical VMEM (so < 64 MiB on v7x, > 64 MiB on v5e/v6e).
    cap = _vmem_cap_bytes()
    out_isz = jnp.dtype(out_dtype).itemsize
    w_bufs = 2
    if v_tiles >= 3 and int(1.3 * _vmem_need_bytes(tm_eff, tn, k_pad, out_isz, 3)) <= cap:
        w_bufs = 3
    need = _vmem_need_bytes(tm_eff, tn, k_pad, out_isz, w_bufs)
    vmem_limit = min(max(int(1.3 * need), 16 * 1024 * 1024), cap)

    if w_bufs == 3:
        w_spec = pl.BlockSpec((k_pad, tn), w_map, pipeline_mode=pl.Buffered(3))
    else:
        w_spec = pl.BlockSpec((k_pad, tn), w_map)

    in_specs = [
        pl.BlockSpec((tm_eff, k_pad), x_map),
        w_spec,
        pl.BlockSpec((1, tn), w_map),     # mean bias row, indexed by vocab tile
    ]
    out_spec = pl.BlockSpec((tm_eff, tn), o_map)

    out_flat = pl.pallas_call(
        _uniform_proj_kernel,
        out_shape=jax.ShapeDtypeStruct((m_pad, v_pad), out_dtype),
        grid_spec=pltpu.PrefetchScalarGridSpec(
            num_scalar_prefetch=0,
            grid=grid,
            in_specs=in_specs,
            out_specs=out_spec,
        ),
        compiler_params=pltpu.CompilerParams(
            dimension_semantics=("parallel", "parallel"),
            vmem_limit_bytes=vmem_limit,
        ),
    )(x_cat, w_cat, b_mean)

    logits = out_flat[:M, :vocab].reshape(B, S, vocab)
    return logits, None


def _reference(unprojected_outs, weights, biases):
    logits = [
        jnp.einsum("bsd,vd->bsv", o, w) + b
        for o, w, b in zip(unprojected_outs, weights, biases)
    ]
    return jnp.mean(jnp.stack(logits), axis=0)


if __name__ == "__main__":
    key = jax.random.PRNGKey(0)

    batch, seq = 2, 8
    out_embed_dims = [32, 48]          # two decoder networks
    vocab_size = 128

    keys = jax.random.split(key, 3 * len(out_embed_dims))
    weights, biases, unprojected_outs = [], [], []
    ki = 0
    for dim in out_embed_dims:
        weights.append(
            0.02 * jax.random.normal(keys[ki], (vocab_size, dim), jnp.float32))
        ki += 1
        biases.append(
            0.01 * jax.random.normal(keys[ki], (vocab_size,), jnp.float32))
        ki += 1
    for dim in out_embed_dims:
        unprojected_outs.append(
            jax.random.normal(keys[ki], (batch, seq, dim), jnp.float32))
        ki += 1

    # Parameter prep is done once (amortized); forward is the hot path.
    params = prepare_uniform_params(weights, biases)
    logits, ptt = uniform_strategy_forward(unprojected_outs, params)
    logits = jax.block_until_ready(logits)

    ref = _reference(unprojected_outs, weights, biases)
    assert ptt is None
    assert logits.shape == (batch, seq, vocab_size)
    # bf16 inputs/weights/output (fp32 MXU accumulation) -> loosened tolerance.
    err = jnp.max(jnp.abs(logits.astype(jnp.float32) - ref))
    assert jnp.allclose(logits.astype(jnp.float32), ref, atol=2e-2, rtol=2e-2), float(err)

    print("KERNEL_OK")
</pallas_src>

<mosaic_0001>
module attributes {stable_mosaic.version = 11 : i64} {
  func.func @_uniform_proj_kernel(%arg0: i32, %arg1: i32, %arg2: memref<16x80xbf16, #tpu.memory_space<vmem>>, %arg3: memref<80x128xbf16, #tpu.memory_space<vmem>>, %arg4: memref<1x128xf32, #tpu.memory_space<vmem>>, %arg5: memref<16x128xbf16, #tpu.memory_space<vmem>>) attributes {dimension_semantics = [#tpu.dimension_semantics<parallel>, #tpu.dimension_semantics<parallel>], iteration_bounds = array<i64: 1, 1>, scalar_prefetch = 0 : i64, scratch_operands = 0 : i64, tpu.core_type = #tpu.core_type<tc>, window_params = [{transform_indices = @transform_0, window_bounds = array<i64: 16, 80>}, {transform_indices = @transform_1, window_bounds = array<i64: 80, 128>}, {transform_indices = @transform_2, window_bounds = array<i64: 1, 128>}, {transform_indices = @transform_3, window_bounds = array<i64: 16, 128>}]} {
    %c0 = arith.constant 0 : index
    %c0_0 = arith.constant 0 : index
    %0 = vector.load %arg2[%c0, %c0_0] : memref<16x80xbf16, #tpu.memory_space<vmem>>, vector<16x80xbf16>
    %c0_1 = arith.constant 0 : index
    %c0_2 = arith.constant 0 : index
    %1 = vector.load %arg3[%c0_1, %c0_2] : memref<80x128xbf16, #tpu.memory_space<vmem>>, vector<80x128xbf16>
    %cst = arith.constant dense<0.000000e+00> : vector<16x128xf32>
    %2 = tpu.matmul %0, %1, %cst {dimension_numbers = #tpu.dot_dimension_numbers<[1], [0], [0], [1], [0, 0, 1, 1], [], []>} : vector<16x80xbf16>, vector<80x128xbf16>, vector<16x128xf32> -> vector<16x128xf32>
    %c0_3 = arith.constant 0 : index
    %c0_4 = arith.constant 0 : index
    %3 = vector.load %arg4[%c0_3, %c0_4] : memref<1x128xf32, #tpu.memory_space<vmem>>, vector<1x128xf32>
    %4 = vector.broadcast %3 : vector<1x128xf32> to vector<16x128xf32>
    %5 = arith.addf %2, %4 : vector<16x128xf32>
    %6 = arith.truncf %5 : vector<16x128xf32> to vector<16x128xbf16>
    %c0_5 = arith.constant 0 : index
    %c0_6 = arith.constant 0 : index
    %7 = vector.load %arg5[%c0_5, %c0_6] : memref<16x128xbf16, #tpu.memory_space<vmem>>, vector<16x128xbf16>
    tpu.vector_store %arg5[%c0_5, %c0_6], %6 {strides = array<i32>} : memref<16x128xbf16, #tpu.memory_space<vmem>>, vector<16x128xbf16>,
    return
  }
  func.func @transform_0(%arg0: i32, %arg1: i32) -> (i32, i32) {
    %c0_i32 = arith.constant 0 : i32
    %c0_i32_0 = arith.constant 0 : i32
    return %arg0, %c0_i32 : i32, i32
  }
  func.func @transform_1(%arg0: i32, %arg1: i32) -> (i32, i32) {
    %c0_i32 = arith.constant 0 : i32
    %c0_i32_0 = arith.constant 0 : i32
    return %c0_i32, %arg1 : i32, i32
  }
  func.func @transform_2(%arg0: i32, %arg1: i32) -> (i32, i32) {
    %c0_i32 = arith.constant 0 : i32
    %c0_i32_0 = arith.constant 0 : i32
    return %c0_i32, %arg1 : i32, i32
  }
  func.func @transform_3(%arg0: i32, %arg1: i32) -> (i32, i32) {
    %c0_i32 = arith.constant 0 : i32
    return %arg0, %arg1 : i32, i32
  }
}

</mosaic_0001>

<llo_original>
// kernel: tpu_custom_call.1
$region0: #{tpu_custom_call.1}
  #allocation0 [shape = 'u32[]', space=smem, size = 0x4, offset = 0x4, fixed_abs, tag = 'smem constant byte address 0x4 - core index']
  #allocation1 [shape = 'u32[144,128]{1,0:T(1,128)}', space=vmem, size = 0x12000, scoped, tag = 'internal scratch']
  %s0 = inlined_call_operand.hbm [shape: bf16[16,80], index: 0, kind: input, shape index: {}]
  %s1 = inlined_call_operand.hbm [shape: bf16[80,128], index: 1, kind: input, shape index: {}]
  %s2 = inlined_call_operand.vmem [shape: f32[1,128], index: 2, kind: input, shape index: {}]
  %s3 = inlined_call_operand.hbm [shape: bf16[16,128], index: 3, kind: output, shape index: {}]
  %s4 = sld [smem:[#allocation0]]
  $region30: #{tpu_custom_call.1} parent=0
    _
  %s6 = ssub.s32 1, %s4
  %s7 = scalar_select 0, %s6, %s4
  $region1: #{tpu_custom_call.1} parent=0
    #allocation2 [shape = 'u8[4096]{0}', space=vmem, size = 0x1000, scoped, tag = 'input window, operand 0, single buffered']
    #allocation3 [shape = 's32[1]{0}', space=sflag, size = 0x4, scoped, tag = 'scoped memory for tpu_custom_call.1']
    #allocation4 [shape = 's32[1]{0}', space=sflag, size = 0x4, scoped, tag = 'scoped memory for tpu_custom_call.1']
    #allocation5 [shape = 'u8[20480]{0}', space=vmem, size = 0x5000, scoped, tag = 'input window, operand 1, single buffered']
    #allocation6 [shape = 's32[1]{0}', space=sflag, size = 0x4, scoped, tag = 'scoped memory for tpu_custom_call.1']
    #allocation7 [shape = 'u8[4096]{0}', space=vmem, size = 0x1000, scoped, tag = 'output window, operand 0, single buffered']
    %8 = vsyncpa [#allocation3], 0
    %9 = vsyncpa [#allocation6], 0
    %10 = vsyncpa [#allocation4], 0
    // Predicated region
    $region2: #{tpu_custom_call.1} parent=1 // pred_check
      _
    $region3: #{tpu_custom_call.1} parent=1 // pred_check_branch
      %12 = sbr.rel (0) target = $region5
    $region4: #{tpu_custom_call.1} parent=1 // pred_region
      %s14 = ssub.s32 128, 128
      %15 = vsyncadd [#allocation3], %s14
      %s16 = sshll.u32 [#allocation2], 4
      %s17 = int_to_ptr.vmem [resolvable:$true] %s16
      %22 = dma.hbm_to_vmem [thread:$0]  %s0, 128, %s17, [#allocation3], 64, 64, 4
    $region5: #{tpu_custom_call.1} parent=1 // pred_fallthru
      _
    // Predicated region
    $region6: #{tpu_custom_call.1} parent=1 // pred_check
      _
    $region7: #{tpu_custom_call.1} parent=1 // pred_check_branch
      %24 = sbr.rel (0) target = $region9
    $region8: #{tpu_custom_call.1} parent=1 // pred_region
      %s26 = ssub.s32 640, 640
      %27 = vsyncadd [#allocation6], %s26
      %s28 = sshll.u32 [#allocation5], 4
      %s29 = int_to_ptr.vmem [resolvable:$true] %s28
      %34 = dma.hbm_to_vmem [thread:$0]  %s1, 640, %s29, [#allocation6], 64, 64, 4
    $region9: #{tpu_custom_call.1} parent=1 // pred_fallthru
      _
    // Predicated region
    $region10: #{tpu_custom_call.1} parent=1 // pred_check
      _
    $region11: #{tpu_custom_call.1} parent=1 // pred_check_branch
      %36 = sbr.rel (0) target = $region13
    $region12: #{tpu_custom_call.1} parent=1 // pred_region
      _
    $region13: #{tpu_custom_call.1} parent=1 // pred_fallthru
      _
    // Predicated region
    $region14: #{tpu_custom_call.1} parent=1 // pred_check
      _
    $region15: #{tpu_custom_call.1} parent=1 // pred_check_branch
      %38 = sbr.rel (0) target = $region17
    $region16: #{tpu_custom_call.1} parent=1 // pred_region
      %39 = dma.done [#allocation3], 128
    $region17: #{tpu_custom_call.1} parent=1 // pred_fallthru
      _
    // Predicated region
    $region18: #{tpu_custom_call.1} parent=1 // pred_check
      _
    $region19: #{tpu_custom_call.1} parent=1 // pred_check_branch
      %41 = sbr.rel (0) target = $region21
    $region20: #{tpu_custom_call.1} parent=1 // pred_region
      %42 = dma.done [#allocation6], 640
    $region21: #{tpu_custom_call.1} parent=1 // pred_fallthru
      _
    %v44 = vld [vmem:[#allocation2] sm:$0xf]
    %v45 = vld [vmem:[#allocation2 + $0x4] sm:$0xf]
    %v46 = vld [vmem:[#allocation5] sm:$0xf]
    %v47 = vld [vmem:[#allocation5 + $0x4] sm:$0xf]
    %v48 = vld [vmem:[#allocation5 + $0x8] sm:$0xf]
    %v49 = vld [vmem:[#allocation5 + $0xc] sm:$0xf]
    %v50 = vld [vmem:[#allocation5 + $0x10] sm:$0xf]
    %v51 = vld [vmem:[#allocation5 + $0x14] sm:$0xf]
    %v52 = vld [vmem:[#allocation5 + $0x18] sm:$0xf]
    %v53 = vld [vmem:[#allocation5 + $0x1c] sm:$0xf]
    %v54 = vld [vmem:[#allocation5 + $0x20] sm:$0xf]
    %v55 = vld [vmem:[#allocation5 + $0x24] sm:$0xf]
    %v56 = vld [vmem:[%s2] sm:$0x1]
    %v58 = vlaneseq
    %v59 = vshrl.u32 %v58, 7
    %v60 = vsub.s32 0, %v59
    %v61 = vrot.slane %v56, %v60
    %v65 = vunpack.c.l.b16 %v44
    %v66 = vunpack.c.l.b16 %v45
    %v67 = vpack.c.b16 %v66, %v65
    %v78 = vunpack.c.l.b16 %v46
    %v79 = vunpack.c.l.b16 %v47
    %v80 = vunpack.c.l.b16 %v48
    %v81 = vunpack.c.l.b16 %v49
    %v82 = vunpack.c.l.b16 %v50
    %v83 = vunpack.c.l.b16 %v51
    %v84 = vunpack.c.l.b16 %v52
    %v85 = vunpack.c.l.b16 %v53
    %v86 = vunpack.c.l.b16 %v54
    %v87 = vunpack.c.l.b16 %v55
    %v88 = vpack.c.b16 %v79, %v78
    %v89 = vpack.c.b16 %v81, %v80
    %v90 = vpack.c.b16 %v83, %v82
    %v91 = vpack.c.b16 %v85, %v84
    %v92 = vpack.c.b16 %v87, %v86
    %vm98 = vcmask 654336
    %v100 = vsel %vm98, %v67, 0
    %102 = vmatprep.subr.bf16.mxu0 0
    %103 = vmatpush1.bf16.msra.mxu0 %v88
    %104 = vmatprep.subr.bf16.mxu0 0
    %105 = vmatpush1.bf16.msra.mxu0 %v89
    %106 = vmatprep.subr.bf16.mxu0 0
    %107 = vmatpush1.bf16.msra.mxu0 %v90
    %108 = vmatprep.subr.bf16.mxu0 0
    %109 = vmatpush1.bf16.msra.mxu0 %v91
    %110 = vmatprep.subr.bf16.mxu0 0
    %111 = vmatpush1.bf16.msra.mxu0 %v92
    %112 = vmatprep.subr.bf16.mxu0 0
    %113 = vmatpush1.bf16.msra.mxu0 0
    %114 = vmatprep.subr.bf16.mxu0 0
    %115 = vmatpush1.bf16.msra.mxu0 0
    %116 = vmatprep.subr.bf16.mxu0 0
    %117 = vmatpush1.bf16.msra.mxu0 0
    %118 = vmatprep.subr.bf16.mxu0 0
    %119 = vmatpush1.bf16.msra.mxu0 0
    %120 = vmatprep.subr.bf16.mxu0 0
    %121 = vmatpush1.bf16.msra.mxu0 0
    %122 = vmatprep.subr.bf16.mxu0 0
    %123 = vmatpush1.bf16.msra.mxu0 0
    %124 = vmatprep.subr.bf16.mxu0 0
    %125 = vmatpush1.bf16.msra.mxu0 0
    %126 = vmatprep.subr.bf16.mxu0 0
    %127 = vmatpush1.bf16.msra.mxu0 0
    %128 = vmatprep.subr.bf16.mxu0 0
    %129 = vmatpush1.bf16.msra.mxu0 0
    %130 = vmatprep.subr.bf16.mxu0 0
    %131 = vmatpush1.bf16.msra.mxu0 0
    %132 = vmatprep.subr.bf16.mxu0 0
    %133 = vmatpush1.bf16.msra.mxu0 0
    %134 = vmatprep.mubr.bf16.mxu0 0
    %135 = vmatmul.mubr.bf16.gmra.mrb[0].mxu0 %v100
    %v136 = vpop.f32.mrb[0].mxu0
    %v137 = vadd.f32 %v61, %v136
    %v138 = vpop.f32.mrb[0].mxu0
    %v139 = vpop.f32.mrb[0].mxu0
    %v140 = vadd.f32 %v61, %v139
    %v141 = vpop.f32.mrb[0].mxu0
    %142 = vdwg.mxu0
    %v143 = vpack.c.bf16 %v140, %v137
    %v145 = vunpack.c.l.b16 %v143
    %v146 = vunpack.c.h.b16 %v143
    %v147 = vpack.c.b16 %v145, %v145
    %v148 = vpack.c.b16 %v146, %v146
    %151 = vst [vmem:[#allocation7] sm:$0xf] %v147
    %152 = vst [vmem:[#allocation7 + $0x4] sm:$0xf] %v148
    // Predicated region
    $region22: #{tpu_custom_call.1} parent=1 // pred_check
      _
    $region23: #{tpu_custom_call.1} parent=1 // pred_check_branch
      %154 = sbr.rel (0) target = $region25
    $region24: #{tpu_custom_call.1} parent=1 // pred_region
      %s156 = ssub.s32 128, 128
      %157 = vsyncadd [#allocation4], %s156
      %s158 = sshll.u32 [#allocation7], 4
      %s159 = int_to_ptr.vmem [resolvable:$true] %s158
      %164 = dma.vmem_to_hbm [thread:$0]  %s159, 128, %s3, [#allocation4], 64, 64, 4
    $region25: #{tpu_custom_call.1} parent=1 // pred_fallthru
      _
    // Predicated region
    $region26: #{tpu_custom_call.1} parent=1 // pred_check
      _
    $region27: #{tpu_custom_call.1} parent=1 // pred_check_branch
      %166 = sbr.rel (0) target = $region29
    $region28: #{tpu_custom_call.1} parent=1 // pred_region
      %167 = dma.done [#allocation4], 128
    $region29: #{tpu_custom_call.1} parent=1 // pred_fallthru
      _
    %168 = vsyncpa [#allocation3], 1
    %169 = vsyncpa [#allocation6], 1
    %170 = vsyncpa [#allocation4], 1

</llo_original>
